<compile_context>
chip_gen: v7x
topology: tpu7x:2x2x1
jax: 0.10.0
libtpu: 0.0.40
codegen_flags: <defaults>
</compile_context>

<pallas_src>
import math
import functools

import jax
import jax.numpy as jnp
from jax import lax
from jax.experimental import pallas as pl
from jax.experimental.pallas import tpu as pltpu


# Scoped-VMEM ceiling for both kernels: above the 16/32 MiB defaults, below
# v7x's 64 MiB physical VMEM (headroom for Mosaic internals).
_VMEM_LIMIT_BYTES = 48 * 1024 * 1024


def _round_up(x, m):
    return ((x + m - 1) // m) * m


# ---------------------------------------------------------------------------
# Kernel 1: linear projection  y = x @ W_t + b
#   W_t is pre-transposed [D_in, D_out] and pre-cast to bf16 at init time.
# ---------------------------------------------------------------------------
def _linear_kernel(x_ref, w_ref, b_ref, o_ref):
    x = x_ref[...].astype(jnp.bfloat16)                       # bf16 MXU operand
    y = jnp.dot(x, w_ref[...], preferred_element_type=jnp.float32)
    o_ref[...] = (y + b_ref[...]).astype(o_ref.dtype)


def pallas_linear(x, w_t, b, *, block_m=512, block_n=512):
    """x: [M, D_in] f32; w_t: [D_in, D_out] bf16 (pre-transposed); b: [D_out] f32."""
    m, d_in = x.shape
    d_out = w_t.shape[1]
    # M tile: sublane-aligned; never a whole-array fallback for ragged M.
    tm = min(block_m, _round_up(m, 8))
    # N tile: full when small (lane-dense store), otherwise a 128-multiple tile.
    tn = d_out if d_out <= block_n else block_n
    grid = (pl.cdiv(m, tm), pl.cdiv(d_out, tn))
    return pl.pallas_call(
        _linear_kernel,
        out_shape=jax.ShapeDtypeStruct((m, d_out), x.dtype),
        grid=grid,
        in_specs=[
            pl.BlockSpec((tm, d_in), lambda i, j: (i, 0)),
            pl.BlockSpec((d_in, tn), lambda i, j: (0, j)),
            pl.BlockSpec((1, tn), lambda i, j: (0, j)),
        ],
        out_specs=pl.BlockSpec((tm, tn), lambda i, j: (i, j)),
        compiler_params=pltpu.CompilerParams(
            dimension_semantics=("parallel", "parallel"),
            vmem_limit_bytes=_VMEM_LIMIT_BYTES,
        ),
    )(x, w_t, b.reshape(1, d_out))


# ---------------------------------------------------------------------------
# Kernel 2: per-batch multi-head attention with relative-position biases.
# qkv_ref is the fused [S, 3D] projection output (batch dim squeezed); heads
# are sliced in-kernel and each head's context is stored immediately.
# ---------------------------------------------------------------------------
def _mha_attn_kernel(qkv_ref, emb_ref, o_ref, *, n_heads, d_k, max_rel_pos):
    S = qkv_ref.shape[0]
    D = n_heads * d_k
    scale = 1.0 / math.sqrt(d_k)
    use_rel = max_rel_pos > 0
    nb = 2 * max_rel_pos + 1

    # Scale q once for all heads (instead of per-head q*scale); cast the MXU
    # operands to bf16; softmax / bias math below stays in f32.
    q = (qkv_ref[:, 0:D] * scale).astype(jnp.bfloat16)
    k = qkv_ref[:, D:2 * D].astype(jnp.bfloat16)
    v = qkv_ref[:, 2 * D:3 * D].astype(jnp.bfloat16)

    if use_rel:
        emb_bf = emb_ref[...].astype(jnp.bfloat16)            # [2R+1, d_k]
        # Head-independent clipped-distance structure, hoisted out of the loop.
        rows = lax.broadcasted_iota(jnp.int32, (S, S), 0)     # i
        cols = lax.broadcasted_iota(jnp.int32, (S, S), 1)     # j
        delta = cols - rows                                    # j - i

    for h in range(n_heads):                                   # small, static
        sl = slice(h * d_k, (h + 1) * d_k)
        qh, kh, vh = q[:, sl], k[:, sl], v[:, sl]

        # scores = qh @ kh^T (contract d_k of both) -- bf16 MXU, f32 accumulate.
        scores = lax.dot_general(qh, kh, (((1,), (1,)), ((), ())),
                                 preferred_element_type=jnp.float32)    # [S, S]

        if use_rel:
            # m_qe[i, r] = sum_d qh[i, d] * E[r, d]   (tiny bf16 MXU matmul)
            m_qe = lax.dot_general(qh, emb_bf, (((1,), (1,)), ((), ())),
                                   preferred_element_type=jnp.float32)  # [S, 2R+1]
            # rel_k[i, j] = m_qe[i, clip(j - i, -R, R) + R].
            # Buckets are nested half-planes when swept by decreasing threshold,
            # so 2R compare+select passes suffice.
            rel_k = jnp.broadcast_to(m_qe[:, nb - 1:nb], (S, S))
            for r in range(nb - 2, -1, -1):
                rel_k = jnp.where(delta <= r - max_rel_pos, m_qe[:, r:r + 1], rel_k)
            scores = scores + rel_k

        # Numerically-stable softmax; divide -> approx reciprocal on the EUP.
        mx = jnp.max(scores, axis=-1, keepdims=True)
        e = jnp.exp(scores - mx)
        denom = jnp.sum(e, axis=-1, keepdims=True)
        attn = e * pl.reciprocal(denom, approx=True)                     # [S, S] f32

        attn_bf = attn.astype(jnp.bfloat16)
        ctx = jnp.dot(attn_bf, vh, preferred_element_type=jnp.float32)   # [S, d_k]

        if use_rel:
            # ab[i, r] = sum_j attn[i, j] * [bucket(i, j) == r];  rel_v = ab @ E.
            ab_cols = []
            for r in range(nb):
                if r == 0:
                    msk = delta <= -max_rel_pos
                elif r == nb - 1:
                    msk = delta >= max_rel_pos
                else:
                    msk = delta == (r - max_rel_pos)
                ab_cols.append(jnp.sum(jnp.where(msk, attn, 0.0),
                                       axis=-1, keepdims=True))
            ab = jnp.concatenate(ab_cols, axis=-1).astype(jnp.bfloat16)   # [S, 2R+1]
            ctx = ctx + jnp.dot(ab, emb_bf, preferred_element_type=jnp.float32)

        # Per-head store (static lane slice): no trailing concatenate; this head's
        # [S, S] / [S, d_k] intermediates are dead immediately afterwards.
        o_ref[:, sl] = ctx.astype(o_ref.dtype)


def pallas_attention(qkv, emb, n_heads, max_rel_pos):
    """qkv: [B, S, 3D] fused projections; emb: [2R+1, d_k] -> context [B, S, D]."""
    B, S, D3 = qkv.shape
    D = D3 // 3
    d_k = D // n_heads
    kernel = functools.partial(_mha_attn_kernel, n_heads=n_heads, d_k=d_k,
                               max_rel_pos=max_rel_pos)
    return pl.pallas_call(
        kernel,
        out_shape=jax.ShapeDtypeStruct((B, S, D), qkv.dtype),
        grid=(B,),
        in_specs=[
            pl.BlockSpec((None, S, D3), lambda b: (b, 0, 0)),   # batch squeezed
            pl.BlockSpec(emb.shape, lambda b: (0, 0)),
        ],
        out_specs=pl.BlockSpec((None, S, D), lambda b: (b, 0, 0)),
        compiler_params=pltpu.CompilerParams(
            dimension_semantics=("parallel",),
            vmem_limit_bytes=_VMEM_LIMIT_BYTES,
        ),
    )(qkv, emb)


# ---------------------------------------------------------------------------
# Parameter setup (torch-layout f32 params + hoisted kernel-side params)
# ---------------------------------------------------------------------------
def init_params(key, h, image_dim, max_rel_pos):
    d_k = image_dim // h
    keys = jax.random.split(key, 9)
    params = {}
    for i, name in enumerate(["q", "k", "v", "fin"]):
        params[f"w_{name}"] = (jax.random.normal(keys[2 * i], (image_dim, image_dim),
                                                 jnp.float32) * 0.05)
        params[f"b_{name}"] = (jax.random.normal(keys[2 * i + 1], (image_dim,),
                                                 jnp.float32) * 0.05)
    # Larger scale so the relative-position bias visibly shapes the output.
    params["rel_pos_emb"] = (jax.random.normal(keys[8], (2 * max_rel_pos + 1, d_k),
                                               jnp.float32) * 0.5)
    return params


def prepare_kernel_params(params):
    """One-time prep: pre-transpose, pre-fuse QKV, and pre-cast weights to bf16
    (hoisted out of the forward path; saves per-call HBM passes over weights)."""
    kp = {}
    w_qkv = jnp.concatenate([params["w_q"], params["w_k"], params["w_v"]], axis=0)
    kp["w_qkv_t"] = w_qkv.T.astype(jnp.bfloat16)                       # [D, 3D]
    kp["b_qkv"] = jnp.concatenate([params["b_q"], params["b_k"], params["b_v"]])
    for name in ("q", "k", "v", "fin"):
        kp[f"w_{name}_t"] = params[f"w_{name}"].T.astype(jnp.bfloat16)  # [D_in, D_out]
        kp[f"b_{name}"] = params[f"b_{name}"]
    kp["rel_pos_emb"] = params["rel_pos_emb"]
    return kp


def multi_headed_attention(kparams, query, key, value, h, max_rel_pos,
                           *, is_self_attention=None):
    """Forward pass of MultiHeadedAttention (mask=None, dropout in eval mode)."""
    B, S, D = query.shape
    d_k = D // h
    if is_self_attention is None:
        # NOTE: object-identity check; pass is_self_attention explicitly to avoid
        # the silent three-projection fallback for distinct-but-equal tracers.
        is_self_attention = (query is key) and (query is value)

    if is_self_attention:
        # Fused QKV projection: one [M, D] x [D, 3D] matmul; output feeds the
        # attention kernel directly (no HBM split of q/k/v).
        qkv = pallas_linear(query.reshape(B * S, D), kparams["w_qkv_t"],
                            kparams["b_qkv"])
    else:
        q = pallas_linear(query.reshape(B * S, D), kparams["w_q_t"], kparams["b_q"])
        k = pallas_linear(key.reshape(B * S, D), kparams["w_k_t"], kparams["b_k"])
        v = pallas_linear(value.reshape(B * S, D), kparams["w_v_t"], kparams["b_v"])
        qkv = jnp.concatenate([q, k, v], axis=-1)
    qkv = qkv.reshape(B, S, 3 * D)

    if max_rel_pos > 0:
        emb = kparams["rel_pos_emb"]                 # [2R+1, d_k]; no [S,S,d_k] blowup
    else:
        emb = jnp.zeros((1, d_k), jnp.float32)       # unused by the kernel

    context = pallas_attention(qkv, emb, h, max_rel_pos)               # [B, S, D]

    out = pallas_linear(context.reshape(B * S, D), kparams["w_fin_t"],
                        kparams["b_fin"])
    return out.reshape(B, S, D)


# ---------------------------------------------------------------------------
# Pure-JAX f32 reference (torch semantics; sanity check)
# ---------------------------------------------------------------------------
def generate_relative_positions_matrix(length, max_relative_positions):
    r = jnp.arange(length)
    distance = r[None, :] - r[:, None]                                  # j - i
    clipped = jnp.clip(distance, -max_relative_positions, max_relative_positions)
    return clipped + max_relative_positions


def reference(params, query, key, value, h, max_rel_pos):
    B, S, D = query.shape
    d_k = D // h
    lin = lambda x, w, b: x @ w.T + b
    q = lin(query, params["w_q"], params["b_q"])
    k = lin(key, params["w_k"], params["b_k"])
    v = lin(value, params["w_v"], params["b_v"])
    sh = lambda x: x.reshape(B, S, h, d_k).transpose(0, 2, 1, 3)
    qh, kh, vh = sh(q) / math.sqrt(d_k), sh(k), sh(v)
    scores = jnp.einsum("bhid,bhjd->bhij", qh, kh)
    if max_rel_pos > 0:
        rel_mat = generate_relative_positions_matrix(S, max_rel_pos)
        rk = params["rel_pos_emb"][rel_mat]
        scores = scores + jnp.einsum("bhid,ijd->bhij", qh, rk)
    attn = jax.nn.softmax(scores, axis=-1)
    ctx = jnp.einsum("bhij,bhjd->bhid", attn, vh)
    if max_rel_pos > 0:
        ctx = ctx + jnp.einsum("bhij,ijd->bhid", attn, rk)
    x = ctx.transpose(0, 2, 1, 3).reshape(B, S, D)
    return lin(x, params["w_fin"], params["b_fin"])


if __name__ == "__main__":
    B, S, D, H = 2, 8, 32, 4
    MAX_REL_POS = 4

    root = jax.random.PRNGKey(0)
    k_params, k_x = jax.random.split(root, 2)
    params = init_params(k_params, H, D, MAX_REL_POS)
    kparams = prepare_kernel_params(params)      # hoisted out of the forward path

    # self-attention inputs (query is key is value), as the module is normally used
    x = jax.random.normal(k_x, (B, S, D), jnp.float32)

    out = multi_headed_attention(kparams, x, x, x, H, MAX_REL_POS,
                                 is_self_attention=True)
    out = jax.block_until_ready(out)

    ref = reference(params, x, x, x, H, MAX_REL_POS)
    assert out.shape == (B, S, D)
    # bf16 MXU operands + approx reciprocal in the softmax -> looser tolerance
    # than exact f32 (errors are ~1e-2 at these scales; a broken relative bias
    # or softmax shifts outputs by >5e-2 and would still trip this check).
    assert float(jnp.max(jnp.abs(out - ref))) < 2.5e-2, "mismatch vs pure-JAX reference"

    print("KERNEL_OK")
</pallas_src>

<mosaic_0001>
module attributes {stable_mosaic.version = 11 : i64} {
  func.func @_linear_kernel(%arg0: i32, %arg1: i32, %arg2: memref<16x32xf32, #tpu.memory_space<vmem>>, %arg3: memref<32x96xbf16, #tpu.memory_space<vmem>>, %arg4: memref<1x96xf32, #tpu.memory_space<vmem>>, %arg5: memref<16x96xf32, #tpu.memory_space<vmem>>) attributes {dimension_semantics = [#tpu.dimension_semantics<parallel>, #tpu.dimension_semantics<parallel>], iteration_bounds = array<i64: 1, 1>, scalar_prefetch = 0 : i64, scratch_operands = 0 : i64, tpu.core_type = #tpu.core_type<tc>, window_params = [{transform_indices = @transform_0, window_bounds = array<i64: 16, 32>}, {transform_indices = @transform_1, window_bounds = array<i64: 32, 96>}, {transform_indices = @transform_2, window_bounds = array<i64: 1, 96>}, {transform_indices = @transform_3, window_bounds = array<i64: 16, 96>}]} {
    %c0 = arith.constant 0 : index
    %c0_0 = arith.constant 0 : index
    %0 = vector.load %arg2[%c0, %c0_0] : memref<16x32xf32, #tpu.memory_space<vmem>>, vector<16x32xf32>
    %1 = arith.truncf %0 : vector<16x32xf32> to vector<16x32xbf16>
    %c0_1 = arith.constant 0 : index
    %c0_2 = arith.constant 0 : index
    %2 = vector.load %arg3[%c0_1, %c0_2] : memref<32x96xbf16, #tpu.memory_space<vmem>>, vector<32x96xbf16>
    %cst = arith.constant dense<0.000000e+00> : vector<16x96xf32>
    %3 = tpu.matmul %1, %2, %cst {dimension_numbers = #tpu.dot_dimension_numbers<[1], [0], [0], [1], [0, 0, 1, 1], [], []>} : vector<16x32xbf16>, vector<32x96xbf16>, vector<16x96xf32> -> vector<16x96xf32>
    %c0_3 = arith.constant 0 : index
    %c0_4 = arith.constant 0 : index
    %4 = vector.load %arg4[%c0_3, %c0_4] : memref<1x96xf32, #tpu.memory_space<vmem>>, vector<1x96xf32>
    %5 = vector.broadcast %4 : vector<1x96xf32> to vector<16x96xf32>
    %6 = arith.addf %3, %5 : vector<16x96xf32>
    %c0_5 = arith.constant 0 : index
    %c0_6 = arith.constant 0 : index
    %7 = vector.load %arg5[%c0_5, %c0_6] : memref<16x96xf32, #tpu.memory_space<vmem>>, vector<16x96xf32>
    tpu.vector_store %arg5[%c0_5, %c0_6], %6 {strides = array<i32>} : memref<16x96xf32, #tpu.memory_space<vmem>>, vector<16x96xf32>,
    return
  }
  func.func @transform_0(%arg0: i32, %arg1: i32) -> (i32, i32) {
    %c0_i32 = arith.constant 0 : i32
    %c0_i32_0 = arith.constant 0 : i32
    return %arg0, %c0_i32 : i32, i32
  }
  func.func @transform_1(%arg0: i32, %arg1: i32) -> (i32, i32) {
    %c0_i32 = arith.constant 0 : i32
    %c0_i32_0 = arith.constant 0 : i32
    return %c0_i32, %arg1 : i32, i32
  }
  func.func @transform_2(%arg0: i32, %arg1: i32) -> (i32, i32) {
    %c0_i32 = arith.constant 0 : i32
    %c0_i32_0 = arith.constant 0 : i32
    return %c0_i32, %arg1 : i32, i32
  }
  func.func @transform_3(%arg0: i32, %arg1: i32) -> (i32, i32) {
    %c0_i32 = arith.constant 0 : i32
    return %arg0, %arg1 : i32, i32
  }
}

</mosaic_0001>

<llo_original>
// kernel: tpu_custom_call.1
$region0: #{tpu_custom_call.1}
  #allocation0 [shape = 'u32[]', space=smem, size = 0x4, offset = 0x4, fixed_abs, tag = 'smem constant byte address 0x4 - core index']
  #allocation1 [shape = 'u32[144,128]{1,0:T(1,128)}', space=vmem, size = 0x12000, scoped, tag = 'internal scratch']
  %s0 = inlined_call_operand.hbm [shape: f32[16,32], index: 0, kind: input, shape index: {}]
  %s1 = inlined_call_operand.hbm [shape: bf16[32,96], index: 1, kind: input, shape index: {}]
  %s2 = inlined_call_operand.vmem [shape: f32[1,96], index: 2, kind: input, shape index: {}]
  %s3 = inlined_call_operand.hbm [shape: f32[16,96], index: 3, kind: output, shape index: {}]
  %s4 = sld [smem:[#allocation0]]
  $region30: #{tpu_custom_call.1} parent=0
    _
  %s6 = ssub.s32 1, %s4
  %s7 = scalar_select 0, %s6, %s4
  $region1: #{tpu_custom_call.1} parent=0
    #allocation2 [shape = 'u8[8192]{0}', space=vmem, size = 0x2000, scoped, tag = 'input window, operand 0, single buffered']
    #allocation3 [shape = 's32[1]{0}', space=sflag, size = 0x4, scoped, tag = 'scoped memory for tpu_custom_call.1']
    #allocation4 [shape = 's32[1]{0}', space=sflag, size = 0x4, scoped, tag = 'scoped memory for tpu_custom_call.1']
    #allocation5 [shape = 'u8[8192]{0}', space=vmem, size = 0x2000, scoped, tag = 'input window, operand 1, single buffered']
    #allocation6 [shape = 's32[1]{0}', space=sflag, size = 0x4, scoped, tag = 'scoped memory for tpu_custom_call.1']
    #allocation7 [shape = 'u8[8192]{0}', space=vmem, size = 0x2000, scoped, tag = 'output window, operand 0, single buffered']
    %8 = vsyncpa [#allocation3], 0
    %9 = vsyncpa [#allocation6], 0
    %10 = vsyncpa [#allocation4], 0
    // Predicated region
    $region2: #{tpu_custom_call.1} parent=1 // pred_check
      _
    $region3: #{tpu_custom_call.1} parent=1 // pred_check_branch
      %12 = sbr.rel (0) target = $region5
    $region4: #{tpu_custom_call.1} parent=1 // pred_region
      %s14 = ssub.s32 256, 256
      %15 = vsyncadd [#allocation3], %s14
      %s16 = sshll.u32 [#allocation2], 4
      %s17 = int_to_ptr.vmem [resolvable:$true] %s16
      %22 = dma.hbm_to_vmem [thread:$0]  %s0, 256, %s17, [#allocation3], 128, 128, 8
    $region5: #{tpu_custom_call.1} parent=1 // pred_fallthru
      _
    // Predicated region
    $region6: #{tpu_custom_call.1} parent=1 // pred_check
      _
    $region7: #{tpu_custom_call.1} parent=1 // pred_check_branch
      %24 = sbr.rel (0) target = $region9
    $region8: #{tpu_custom_call.1} parent=1 // pred_region
      %s26 = ssub.s32 256, 256
      %27 = vsyncadd [#allocation6], %s26
      %s28 = sshll.u32 [#allocation5], 4
      %s29 = int_to_ptr.vmem [resolvable:$true] %s28
      %34 = dma.hbm_to_vmem [thread:$0]  %s1, 256, %s29, [#allocation6], 64, 64, 4
    $region9: #{tpu_custom_call.1} parent=1 // pred_fallthru
      _
    // Predicated region
    $region10: #{tpu_custom_call.1} parent=1 // pred_check
      _
    $region11: #{tpu_custom_call.1} parent=1 // pred_check_branch
      %36 = sbr.rel (0) target = $region13
    $region12: #{tpu_custom_call.1} parent=1 // pred_region
      _
    $region13: #{tpu_custom_call.1} parent=1 // pred_fallthru
      _
    // Predicated region
    $region14: #{tpu_custom_call.1} parent=1 // pred_check
      _
    $region15: #{tpu_custom_call.1} parent=1 // pred_check_branch
      %38 = sbr.rel (0) target = $region17
    $region16: #{tpu_custom_call.1} parent=1 // pred_region
      %39 = dma.done [#allocation3], 256
    $region17: #{tpu_custom_call.1} parent=1 // pred_fallthru
      _
    // Predicated region
    $region18: #{tpu_custom_call.1} parent=1 // pred_check
      _
    $region19: #{tpu_custom_call.1} parent=1 // pred_check_branch
      %41 = sbr.rel (0) target = $region21
    $region20: #{tpu_custom_call.1} parent=1 // pred_region
      %42 = dma.done [#allocation6], 256
    $region21: #{tpu_custom_call.1} parent=1 // pred_fallthru
      _
    %v44 = vld [vmem:[#allocation2] sm:$0xff]
    %v45 = vld [vmem:[#allocation2 + $0x8] sm:$0xff]
    %v46 = vpack.c.bf16 %v45, %v44
    %v47 = vld [vmem:[#allocation5] sm:$0xf]
    %v48 = vld [vmem:[#allocation5 + $0x4] sm:$0xf]
    %v49 = vld [vmem:[#allocation5 + $0x8] sm:$0xf]
    %v50 = vld [vmem:[#allocation5 + $0xc] sm:$0xf]
    %v51 = vld [vmem:[%s2] sm:$0x1]
    %v53 = vlaneseq
    %v54 = vshrl.u32 %v53, 7
    %v55 = vsub.s32 0, %v54
    %v56 = vrot.slane %v51, %v55
    %v62 = vunpack.c.l.b16 %v47
    %v63 = vunpack.c.l.b16 %v48
    %v64 = vunpack.c.l.b16 %v49
    %v65 = vunpack.c.l.b16 %v50
    %v66 = vpack.c.b16 %v63, %v62
    %v67 = vpack.c.b16 %v65, %v64
    %vm70 = vcmask 261120
    %v72 = vsel %vm70, %v46, 0
    %74 = vmatprep.subr.bf16.mxu0 0
    %75 = vmatpush1.bf16.msra.mxu0 %v66
    %76 = vmatprep.subr.bf16.mxu0 0
    %77 = vmatpush1.bf16.msra.mxu0 %v67
    %78 = vmatprep.subr.bf16.mxu0 0
    %79 = vmatpush1.bf16.msra.mxu0 0
    %80 = vmatprep.subr.bf16.mxu0 0
    %81 = vmatpush1.bf16.msra.mxu0 0
    %82 = vmatprep.subr.bf16.mxu0 0
    %83 = vmatpush1.bf16.msra.mxu0 0
    %84 = vmatprep.subr.bf16.mxu0 0
    %85 = vmatpush1.bf16.msra.mxu0 0
    %86 = vmatprep.subr.bf16.mxu0 0
    %87 = vmatpush1.bf16.msra.mxu0 0
    %88 = vmatprep.subr.bf16.mxu0 0
    %89 = vmatpush1.bf16.msra.mxu0 0
    %90 = vmatprep.subr.bf16.mxu0 0
    %91 = vmatpush1.bf16.msra.mxu0 0
    %92 = vmatprep.subr.bf16.mxu0 0
    %93 = vmatpush1.bf16.msra.mxu0 0
    %94 = vmatprep.subr.bf16.mxu0 0
    %95 = vmatpush1.bf16.msra.mxu0 0
    %96 = vmatprep.subr.bf16.mxu0 0
    %97 = vmatpush1.bf16.msra.mxu0 0
    %98 = vmatprep.subr.bf16.mxu0 0
    %99 = vmatpush1.bf16.msra.mxu0 0
    %100 = vmatprep.subr.bf16.mxu0 0
    %101 = vmatpush1.bf16.msra.mxu0 0
    %102 = vmatprep.subr.bf16.mxu0 0
    %103 = vmatpush1.bf16.msra.mxu0 0
    %104 = vmatprep.subr.bf16.mxu0 0
    %105 = vmatpush1.bf16.msra.mxu0 0
    %106 = vmatprep.mubr.bf16.mxu0 0
    %107 = vmatmul.mubr.bf16.gmra.mrb[0].mxu0 %v72
    %v108 = vpop.f32.mrb[0].mxu0
    %v109 = vadd.f32 %v56, %v108
    %v110 = vpop.f32.mrb[0].mxu0
    %v111 = vpop.f32.mrb[0].mxu0
    %v112 = vadd.f32 %v56, %v111
    %v113 = vpop.f32.mrb[0].mxu0
    %114 = vdwg.mxu0
    %vm115 = vcmask 785408
    %116 = vst.msk [vmem:[#allocation7] sm:$0xff] %vm115, %v109
    %117 = vst.msk [vmem:[#allocation7 + $0x8] sm:$0xff] %vm115, %v112
    // Predicated region
    $region22: #{tpu_custom_call.1} parent=1 // pred_check
      _
    $region23: #{tpu_custom_call.1} parent=1 // pred_check_branch
      %119 = sbr.rel (0) target = $region25
    $region24: #{tpu_custom_call.1} parent=1 // pred_region
      %s121 = ssub.s32 256, 256
      %122 = vsyncadd [#allocation4], %s121
      %s123 = sshll.u32 [#allocation7], 4
      %s124 = int_to_ptr.vmem [resolvable:$true] %s123
      %129 = dma.vmem_to_hbm [thread:$0]  %s124, 256, %s3, [#allocation4], 128, 128, 8
    $region25: #{tpu_custom_call.1} parent=1 // pred_fallthru
      _
    // Predicated region
    $region26: #{tpu_custom_call.1} parent=1 // pred_check
      _
    $region27: #{tpu_custom_call.1} parent=1 // pred_check_branch
      %131 = sbr.rel (0) target = $region29
    $region28: #{tpu_custom_call.1} parent=1 // pred_region
      %132 = dma.done [#allocation4], 256
    $region29: #{tpu_custom_call.1} parent=1 // pred_fallthru
      _
    %133 = vsyncpa [#allocation3], 1
    %134 = vsyncpa [#allocation6], 1
    %135 = vsyncpa [#allocation4], 1

</llo_original>
